<compile_context>
chip_gen: v7x
topology: tpu7x:2x2x1
jax: 0.10.0
libtpu: 0.0.40
codegen_flags: <defaults>
</compile_context>

<pallas_src>
import jax
import jax.numpy as jnp
from jax.experimental import pallas as pl
from jax.experimental.pallas import tpu as pltpu


# ---------------------------------------------------------------------------
# Fused Pallas kernel: global-avg-pool + 1x1-conv (linear) head + CE loss
# ---------------------------------------------------------------------------
def make_head_ce_kernel(n_classes):
    """Returns a kernel closed over the (static) real class count.

    x_ref:      [TN, C, HW]   float32   (free NCHW->[N,C,HW] reshape view)
    w_ref:      [C, Kp]       float32   (pre-transposed, class-padded weight)
    b_ref:      [1, Kp]       float32   (class-padded bias)
    y_ref:      [TN, 1]       int32     (labels)
    logits_ref: [TN, Kp]      float32   (lane-dense padded logits)
    loss_ref:   [TN, 1]       float32   (per-sample CE loss)
    """

    def kernel(x_ref, w_ref, b_ref, y_ref, logits_ref, loss_ref):
        # Global average pool over the spatial (lane) axis.  No dtype upcast
        # temp (input is already f32); the reduce streams the VMEM block on
        # the XLU and leaves [TN, C] with C on lanes.
        feat = jnp.mean(x_ref[...], axis=-1)                 # [TN, C]

        # 1x1 conv == linear layer on pooled features (MXU, lane-dense Kp).
        logits = jnp.dot(feat, w_ref[...],
                         preferred_element_type=jnp.float32) + b_ref[...]
        logits_ref[...] = logits                             # [TN, Kp] slab

        # Fused CrossEntropyLoss: mask padded class columns to -inf so they
        # do not contribute to the logsumexp.
        k_ids = jax.lax.broadcasted_iota(jnp.int32, logits.shape, 1)
        masked = jnp.where(k_ids < n_classes, logits, jnp.float32(-1e30))
        m = jnp.max(masked, axis=-1, keepdims=True)
        lse = m + jnp.log(jnp.sum(jnp.exp(masked - m), axis=-1, keepdims=True))
        onehot = (k_ids == y_ref[...]).astype(jnp.float32)
        picked = jnp.sum(logits * onehot, axis=-1, keepdims=True)
        loss_ref[...] = lse - picked

    return kernel


# ---------------------------------------------------------------------------
# Wrapper (glue: free reshape, VMEM-aware batch tiling)
# ---------------------------------------------------------------------------
def fused_head_and_loss(x_nchw, w_ck_p, b_p, y, n_classes, tn=32):
    """x_nchw: [N, C, H, W] f32; w_ck_p: [C, Kp] f32; b_p: [1, Kp] f32;
    y: [N] int. Returns (mean CE loss, logits [N, n_classes])."""
    n, c, h, wd = x_nchw.shape
    hw = h * wd
    kp = w_ck_p.shape[1]

    # ---- zero-copy input prep: contiguous dim-merge only, no HBM pass ----
    x3 = x_nchw.reshape(n, c, hw)
    if x3.dtype != jnp.float32:
        x3 = x3.astype(jnp.float32)
    y2 = y.astype(jnp.int32).reshape(n, 1)

    # ---- VMEM-aware batch tile (v7x: 64 MiB/TC, v5e/v6e: 128 MiB) --------
    c_pad = pl.cdiv(c, 8) * 8          # sublane padding of the block in VMEM
    hw_pad = pl.cdiv(hw, 128) * 128    # lane padding of the block in VMEM
    try:
        vmem_phys = pltpu.get_tpu_info().vmem_capacity_bytes
    except Exception:                  # conservative fallback (v7x-sized)
        vmem_phys = 64 << 20
    budget = max(vmem_phys - (12 << 20), 8 << 20)   # headroom: weight/out/etc.
    while tn > 8 and 2 * tn * c_pad * hw_pad * 4 > budget:
        tn //= 2                       # double-buffered x block must fit
    tn = min(tn, n)
    if tn < n and tn % 8:
        tn = max(8, (tn // 8) * 8)     # keep (8,128) block rule satisfied

    grid = (pl.cdiv(n, tn),)           # ragged last tile handled by Pallas

    x_block_bytes = tn * c_pad * hw_pad * 4
    w_bytes = c_pad * kp * 4
    vmem_needed = 2 * x_block_bytes + 2 * w_bytes + 4 * tn * kp * 4 + (2 << 20)
    vmem_limit = int(min(max(vmem_needed, 32 << 20), vmem_phys - (4 << 20)))

    cost = pl.CostEstimate(
        flops=n * c * hw + 2 * n * c * kp + 6 * n * kp,
        transcendentals=n * kp + n,
        bytes_accessed=(x3.size * 4 + w_ck_p.size * 4 + b_p.size * 4
                        + y2.size * 4 + n * kp * 4 + n * 4),
    )

    logits_p, loss_p = pl.pallas_call(
        make_head_ce_kernel(n_classes),
        out_shape=(
            jax.ShapeDtypeStruct((n, kp), jnp.float32),
            jax.ShapeDtypeStruct((n, 1), jnp.float32),
        ),
        grid=grid,
        in_specs=[
            # If DMA is still exposed at large tn, switch this spec to
            # pipeline_mode=pl.Buffered(3) instead of shrinking the tile.
            pl.BlockSpec((tn, c, hw), lambda i: (i, 0, 0)),   # x tile
            pl.BlockSpec((c, kp), lambda i: (0, 0)),          # weight (invariant)
            pl.BlockSpec((1, kp), lambda i: (0, 0)),          # bias (invariant)
            pl.BlockSpec((tn, 1), lambda i: (i, 0)),          # labels tile
        ],
        out_specs=(
            pl.BlockSpec((tn, kp), lambda i: (i, 0)),         # padded logits
            pl.BlockSpec((tn, 1), lambda i: (i, 0)),          # per-sample loss
        ),
        compiler_params=pltpu.CompilerParams(
            dimension_semantics=("parallel",),
            vmem_limit_bytes=vmem_limit),
        cost_estimate=cost,
    )(x3, w_ck_p, b_p, y2)

    logits = logits_p[:, :n_classes]
    loss = jnp.mean(loss_p[:, 0])
    return loss, logits


# ---------------------------------------------------------------------------
# Module equivalent
# ---------------------------------------------------------------------------
class InceptionV3Pallas:
    """Pallas equivalent of inceptionV3 (replaced classifier head + CE loss)."""

    KP = 128  # lane-dense padded class dimension (do NOT pad to 256)

    def __init__(self, n_classes, in_channels, key):
        self.n_classes = n_classes
        self.in_channels = in_channels
        # _init_weights: normal(0, 0.001) weight, zero bias (Conv2d_1c_1x1.conv)
        kp = max(self.KP, pl.cdiv(n_classes, 128) * 128)
        w_kc = 0.001 * jax.random.normal(
            key, (n_classes, in_channels), dtype=jnp.float32)
        # Pre-transpose + class-pad once ([C, Kp]); bias as [1, Kp].
        w_ck = jnp.transpose(w_kc)                               # [C, K]
        self.w_ck_p = jnp.pad(w_ck, ((0, 0), (0, kp - n_classes)))
        self.b_p = jnp.zeros((1, kp), dtype=jnp.float32)
        self.kp = kp

    def forward(self, x, y, training=True):
        # TODO(synk): frozen checkpoint-loaded InceptionV3 backbone omitted;
        #             `x` is the NCHW f32 feature-map it would emit.
        loss_ce, y_pred = fused_head_and_loss(
            x, self.w_ck_p, self.b_p, y, self.n_classes)
        if training:
            loss2 = 0.0                      # aux loss is zeroed in the module
            loss = loss_ce + 0.4 * loss2
        else:
            loss = jnp.float32(0.0)
        return loss, y_pred


# ---------------------------------------------------------------------------
# Main
# ---------------------------------------------------------------------------
if __name__ == "__main__":
    key = jax.random.PRNGKey(0)
    k_x, k_y, k_w = jax.random.split(key, 3)

    # Small stand-in for the 2048x8x8 Inception feature map.
    N, C, H, W = 2, 128, 8, 8
    K = 16  # n_classes

    x = jax.random.normal(k_x, (N, C, H, W), dtype=jnp.float32)
    y = jax.random.randint(k_y, (N,), 0, K, dtype=jnp.int32)

    model = InceptionV3Pallas(n_classes=K, in_channels=C, key=k_w)

    loss, y_pred = model.forward(x, y, training=True)
    loss = jax.block_until_ready(loss)
    y_pred = jax.block_until_ready(y_pred)

    # Pure-JAX reference (f32 end-to-end, same as the kernel now).
    feat_ref = jnp.mean(x.reshape(N, C, H * W), axis=-1)             # [N, C]
    w_ck = model.w_ck_p[:, :K]
    b_k = model.b_p[0, :K]
    logits_ref = feat_ref @ w_ck + b_k
    lse = jax.scipy.special.logsumexp(logits_ref, axis=-1)
    loss_ref = jnp.mean(lse - logits_ref[jnp.arange(N), y])
    assert jnp.allclose(y_pred, logits_ref, atol=1e-4, rtol=1e-4)
    assert jnp.allclose(loss, loss_ref, atol=1e-4, rtol=1e-4)

    # Eval-mode path (loss == 0, logits only), like the torch module.
    loss_eval, y_pred_eval = model.forward(x, y, training=False)
    jax.block_until_ready(y_pred_eval)
    assert float(loss_eval) == 0.0

    print("KERNEL_OK")
</pallas_src>

<mosaic_0001>
module attributes {stable_mosaic.version = 11 : i64} {
  func.func @kernel(%arg0: i32, %arg1: memref<2x128x64xf32, #tpu.memory_space<vmem>>, %arg2: memref<128x128xf32, #tpu.memory_space<vmem>>, %arg3: memref<1x128xf32, #tpu.memory_space<vmem>>, %arg4: memref<2x1xi32, #tpu.memory_space<vmem>>, %arg5: memref<2x128xf32, #tpu.memory_space<vmem>>, %arg6: memref<2x1xf32, #tpu.memory_space<vmem>>) attributes {dimension_semantics = [#tpu.dimension_semantics<parallel>], iteration_bounds = array<i64: 1>, scalar_prefetch = 0 : i64, scratch_operands = 0 : i64, tpu.core_type = #tpu.core_type<tc>, window_params = [{transform_indices = @transform_0, window_bounds = array<i64: 2, 128, 64>}, {pipeline_mode = #tpu.pipeline_mode<synchronous>, transform_indices = @transform_1, window_bounds = array<i64: 128, 128>}, {pipeline_mode = #tpu.pipeline_mode<synchronous>, transform_indices = @transform_2, window_bounds = array<i64: 1, 128>}, {transform_indices = @transform_3, window_bounds = array<i64: 2, 1>}, {transform_indices = @transform_4, window_bounds = array<i64: 2, 128>}, {transform_indices = @transform_5, window_bounds = array<i64: 2, 1>}]} {
    %c0 = arith.constant 0 : index
    %c0_0 = arith.constant 0 : index
    %c0_1 = arith.constant 0 : index
    %0 = vector.load %arg1[%c0, %c0_0, %c0_1] : memref<2x128x64xf32, #tpu.memory_space<vmem>>, vector<2x128x64xf32>
    %cst = arith.constant dense<0.000000e+00> : vector<2x128xf32>
    %1 = vector.multi_reduction <add>, %0, %cst [2] : vector<2x128x64xf32> to vector<2x128xf32>
    %cst_2 = arith.constant 6.400000e+01 : f32
    %2 = vector.broadcast %cst_2 : f32 to vector<2x128xf32>
    %3 = arith.divf %1, %2 : vector<2x128xf32>
    %c0_3 = arith.constant 0 : index
    %c0_4 = arith.constant 0 : index
    %4 = vector.load %arg2[%c0_3, %c0_4] : memref<128x128xf32, #tpu.memory_space<vmem>>, vector<128x128xf32>
    %cst_5 = arith.constant dense<0.000000e+00> : vector<2x128xf32>
    %5 = tpu.matmul %3, %4, %cst_5 {dimension_numbers = #tpu.dot_dimension_numbers<[1], [0], [0], [1], [0, 0, 1, 1], [], []>} : vector<2x128xf32>, vector<128x128xf32>, vector<2x128xf32> -> vector<2x128xf32>
    %c0_6 = arith.constant 0 : index
    %c0_7 = arith.constant 0 : index
    %6 = vector.load %arg3[%c0_6, %c0_7] : memref<1x128xf32, #tpu.memory_space<vmem>>, vector<1x128xf32>
    %7 = vector.broadcast %6 : vector<1x128xf32> to vector<2x128xf32>
    %8 = arith.addf %5, %7 : vector<2x128xf32>
    %c0_8 = arith.constant 0 : index
    %c0_9 = arith.constant 0 : index
    %9 = vector.load %arg5[%c0_8, %c0_9] : memref<2x128xf32, #tpu.memory_space<vmem>>, vector<2x128xf32>
    tpu.vector_store %arg5[%c0_8, %c0_9], %8 {strides = array<i32>} : memref<2x128xf32, #tpu.memory_space<vmem>>, vector<2x128xf32>,
    %10 = tpu.iota {dimensions = array<i32: 1>} : vector<2x128xi32>
    %c16_i32 = arith.constant 16 : i32
    %11 = vector.broadcast %c16_i32 : i32 to vector<2x128xi32>
    %12 = arith.cmpi slt, %10, %11 : vector<2x128xi32>
    %cst_10 = arith.constant -1.000000e+30 : f32
    %13 = vector.broadcast %cst_10 : f32 to vector<2x128xf32>
    %14 = arith.select %12, %8, %13 : vector<2x128xi1>, vector<2x128xf32>
    %cst_11 = arith.constant dense<0xFF800000> : vector<2xf32>
    %15 = vector.multi_reduction <maximumf>, %14, %cst_11 [1] : vector<2x128xf32> to vector<2xf32>
    %16 = vector.shape_cast %15 : vector<2xf32> to vector<2x1xf32>
    %17 = vector.broadcast %16 : vector<2x1xf32> to vector<2x128xf32>
    %18 = arith.subf %14, %17 : vector<2x128xf32>
    %19 = math.exp %18 : vector<2x128xf32>
    %cst_12 = arith.constant dense<0.000000e+00> : vector<2xf32>
    %20 = vector.multi_reduction <add>, %19, %cst_12 [1] : vector<2x128xf32> to vector<2xf32>
    %21 = vector.shape_cast %20 : vector<2xf32> to vector<2x1xf32>
    %22 = math.log %21 : vector<2x1xf32>
    %23 = arith.addf %16, %22 : vector<2x1xf32>
    %c0_13 = arith.constant 0 : index
    %c0_14 = arith.constant 0 : index
    %24 = vector.load %arg4[%c0_13, %c0_14] : memref<2x1xi32, #tpu.memory_space<vmem>>, vector<2x1xi32>
    %25 = vector.broadcast %24 : vector<2x1xi32> to vector<2x128xi32>
    %26 = arith.cmpi eq, %10, %25 : vector<2x128xi32>
    %27 = arith.extui %26 : vector<2x128xi1> to vector<2x128xi32>
    %28 = arith.sitofp %27 : vector<2x128xi32> to vector<2x128xf32>
    %29 = arith.mulf %8, %28 : vector<2x128xf32>
    %cst_15 = arith.constant dense<0.000000e+00> : vector<2xf32>
    %30 = vector.multi_reduction <add>, %29, %cst_15 [1] : vector<2x128xf32> to vector<2xf32>
    %31 = vector.shape_cast %30 : vector<2xf32> to vector<2x1xf32>
    %32 = arith.subf %23, %31 : vector<2x1xf32>
    %c0_16 = arith.constant 0 : index
    %c0_17 = arith.constant 0 : index
    %33 = vector.load %arg6[%c0_16, %c0_17] : memref<2x1xf32, #tpu.memory_space<vmem>>, vector<2x1xf32>
    tpu.vector_store %arg6[%c0_16, %c0_17], %32 {strides = array<i32>} : memref<2x1xf32, #tpu.memory_space<vmem>>, vector<2x1xf32>,
    return
  }
  func.func @transform_0(%arg0: i32) -> (i32, i32, i32) {
    %c0_i32 = arith.constant 0 : i32
    %c0_i32_0 = arith.constant 0 : i32
    %c0_i32_1 = arith.constant 0 : i32
    return %arg0, %c0_i32, %c0_i32_0 : i32, i32, i32
  }
  func.func @transform_1(%arg0: i32) -> (i32, i32) {
    %c0_i32 = arith.constant 0 : i32
    %c0_i32_0 = arith.constant 0 : i32
    %c0_i32_1 = arith.constant 0 : i32
    return %c0_i32, %c0_i32_0 : i32, i32
  }
  func.func @transform_2(%arg0: i32) -> (i32, i32) {
    %c0_i32 = arith.constant 0 : i32
    %c0_i32_0 = arith.constant 0 : i32
    %c0_i32_1 = arith.constant 0 : i32
    return %c0_i32, %c0_i32_0 : i32, i32
  }
  func.func @transform_3(%arg0: i32) -> (i32, i32) {
    %c0_i32 = arith.constant 0 : i32
    %c0_i32_0 = arith.constant 0 : i32
    return %arg0, %c0_i32 : i32, i32
  }
  func.func @transform_4(%arg0: i32) -> (i32, i32) {
    %c0_i32 = arith.constant 0 : i32
    %c0_i32_0 = arith.constant 0 : i32
    return %arg0, %c0_i32 : i32, i32
  }
  func.func @transform_5(%arg0: i32) -> (i32, i32) {
    %c0_i32 = arith.constant 0 : i32
    %c0_i32_0 = arith.constant 0 : i32
    return %arg0, %c0_i32 : i32, i32
  }
}

</mosaic_0001>

<llo_original>
// kernel: tpu_custom_call.1
$region0: #{tpu_custom_call.1}
  #allocation0 [shape = 'u32[]', space=smem, size = 0x4, offset = 0x4, fixed_abs, tag = 'smem constant byte address 0x4 - core index']
  #allocation1 [shape = 'u32[144,128]{1,0:T(1,128)}', space=vmem, size = 0x12000, scoped, tag = 'internal scratch']
  %s0 = inlined_call_operand.vmem [shape: f32[2,128,64], index: 0, kind: input, shape index: {}]
  %s1 = inlined_call_operand.vmem [shape: f32[128,128], index: 1, kind: input, shape index: {}]
  %s2 = inlined_call_operand.vmem [shape: f32[1,128], index: 2, kind: input, shape index: {}]
  %s3 = inlined_call_operand.vmem [shape: s32[2,1], index: 3, kind: input, shape index: {}]
  %s4 = inlined_call_operand.hbm [shape: f32[2,128], index: 4, kind: output, shape index: {0}]
  %s5 = inlined_call_operand.vmem [shape: f32[2,1], index: 5, kind: output, shape index: {1}]
  %6 = xla_tuple %s4, %s5
  %s7 = sld [smem:[#allocation0]]
  $region34: #{tpu_custom_call.1} parent=0
    _
  %s9 = ssub.s32 1, %s7
  %s10 = scalar_select 0, %s9, %s7
  $region1: #{tpu_custom_call.1} parent=0
    #allocation2 [shape = 'u8[1024]{0}', space=vmem, size = 0x400, scoped, tag = 'output window, operand 0, single buffered']
    #allocation3 [shape = 's32[1]{0}', space=sflag, size = 0x4, scoped, tag = 'scoped memory for tpu_custom_call.1']
    %11 = vsyncpa [#allocation3], 0
    // Predicated region
    $region2: #{tpu_custom_call.1} parent=1 // pred_check
      _
    $region3: #{tpu_custom_call.1} parent=1 // pred_check_branch
      %13 = sbr.rel (0) target = $region5
    $region4: #{tpu_custom_call.1} parent=1 // pred_region
      _
    $region5: #{tpu_custom_call.1} parent=1 // pred_fallthru
      _
    // Predicated region
    $region6: #{tpu_custom_call.1} parent=1 // pred_check
      _
    $region7: #{tpu_custom_call.1} parent=1 // pred_check_branch
      %15 = sbr.rel (0) target = $region9
    $region8: #{tpu_custom_call.1} parent=1 // pred_region
      _
    $region9: #{tpu_custom_call.1} parent=1 // pred_fallthru
      _
    // Predicated region
    $region10: #{tpu_custom_call.1} parent=1 // pred_check
      _
    $region11: #{tpu_custom_call.1} parent=1 // pred_check_branch
      %17 = sbr.rel (0) target = $region13
    $region12: #{tpu_custom_call.1} parent=1 // pred_region
      _
    $region13: #{tpu_custom_call.1} parent=1 // pred_fallthru
      _
    // Predicated region
    $region14: #{tpu_custom_call.1} parent=1 // pred_check
      _
    $region15: #{tpu_custom_call.1} parent=1 // pred_check_branch
      %19 = sbr.rel (0) target = $region17
    $region16: #{tpu_custom_call.1} parent=1 // pred_region
      _
    $region17: #{tpu_custom_call.1} parent=1 // pred_fallthru
      _
    %v20 = vld [vmem:[%s0] sm:$0xff]
    %v21 = vld [vmem:[%s0 + $0x8] sm:$0xff]
    %v22 = vld [vmem:[%s0 + $0x10] sm:$0xff]
    %v23 = vld [vmem:[%s0 + $0x18] sm:$0xff]
    %v24 = vld [vmem:[%s0 + $0x20] sm:$0xff]
    %v25 = vld [vmem:[%s0 + $0x28] sm:$0xff]
    %v26 = vld [vmem:[%s0 + $0x30] sm:$0xff]
    %v27 = vld [vmem:[%s0 + $0x38] sm:$0xff]
    %v28 = vld [vmem:[%s0 + $0x40] sm:$0xff]
    %v29 = vld [vmem:[%s0 + $0x48] sm:$0xff]
    %v30 = vld [vmem:[%s0 + $0x50] sm:$0xff]
    %v31 = vld [vmem:[%s0 + $0x58] sm:$0xff]
    %v32 = vld [vmem:[%s0 + $0x60] sm:$0xff]
    %v33 = vld [vmem:[%s0 + $0x68] sm:$0xff]
    %v34 = vld [vmem:[%s0 + $0x70] sm:$0xff]
    %v35 = vld [vmem:[%s0 + $0x78] sm:$0xff]
    %v36 = vld [vmem:[%s0 + $0x80] sm:$0xff]
    %v37 = vld [vmem:[%s0 + $0x88] sm:$0xff]
    %v38 = vld [vmem:[%s0 + $0x90] sm:$0xff]
    %v39 = vld [vmem:[%s0 + $0x98] sm:$0xff]
    %v40 = vld [vmem:[%s0 + $0xa0] sm:$0xff]
    %v41 = vld [vmem:[%s0 + $0xa8] sm:$0xff]
    %v42 = vld [vmem:[%s0 + $0xb0] sm:$0xff]
    %v43 = vld [vmem:[%s0 + $0xb8] sm:$0xff]
    %v44 = vld [vmem:[%s0 + $0xc0] sm:$0xff]
    %v45 = vld [vmem:[%s0 + $0xc8] sm:$0xff]
    %v46 = vld [vmem:[%s0 + $0xd0] sm:$0xff]
    %v47 = vld [vmem:[%s0 + $0xd8] sm:$0xff]
    %v48 = vld [vmem:[%s0 + $0xe0] sm:$0xff]
    %v49 = vld [vmem:[%s0 + $0xe8] sm:$0xff]
    %v50 = vld [vmem:[%s0 + $0xf0] sm:$0xff]
    %v51 = vld [vmem:[%s0 + $0xf8] sm:$0xff]
    %vm52 = vcmask 523264
    %v53 = vsel %vm52, %v20, 0.0
    %54 = vadd.xlane.f32.xlu0 %v53
    %v55 = vpop.xlane.xlu0 %54
    %v56 = vsel %vm52, %v21, 0.0
    %57 = vadd.xlane.f32.xlu0 %v56
    %v58 = vpop.xlane.xlu0 %57
    %v59 = vsel %vm52, %v22, 0.0
    %60 = vadd.xlane.f32.xlu0 %v59
    %v61 = vpop.xlane.xlu0 %60
    %v62 = vsel %vm52, %v23, 0.0
    %63 = vadd.xlane.f32.xlu0 %v62
    %v64 = vpop.xlane.xlu0 %63
    %v65 = vsel %vm52, %v24, 0.0
    %66 = vadd.xlane.f32.xlu0 %v65
    %v67 = vpop.xlane.xlu0 %66
    %v68 = vsel %vm52, %v25, 0.0
    %69 = vadd.xlane.f32.xlu0 %v68
    %v70 = vpop.xlane.xlu0 %69
    %v71 = vsel %vm52, %v26, 0.0
    %72 = vadd.xlane.f32.xlu0 %v71
    %v73 = vpop.xlane.xlu0 %72
    %v74 = vsel %vm52, %v27, 0.0
    %75 = vadd.xlane.f32.xlu0 %v74
    %v76 = vpop.xlane.xlu0 %75
    %v77 = vsel %vm52, %v28, 0.0
    %78 = vadd.xlane.f32.xlu0 %v77
    %v79 = vpop.xlane.xlu0 %78
    %v80 = vsel %vm52, %v29, 0.0
    %81 = vadd.xlane.f32.xlu0 %v80
    %v82 = vpop.xlane.xlu0 %81
    %v83 = vsel %vm52, %v30, 0.0
    %84 = vadd.xlane.f32.xlu0 %v83
    %v85 = vpop.xlane.xlu0 %84
    %v86 = vsel %vm52, %v31, 0.0
    %87 = vadd.xlane.f32.xlu0 %v86
    %v88 = vpop.xlane.xlu0 %87
    %v89 = vsel %vm52, %v32, 0.0
    %90 = vadd.xlane.f32.xlu0 %v89
    %v91 = vpop.xlane.xlu0 %90
    %v92 = vsel %vm52, %v33, 0.0
    %93 = vadd.xlane.f32.xlu0 %v92
    %v94 = vpop.xlane.xlu0 %93
    %v95 = vsel %vm52, %v34, 0.0
    %96 = vadd.xlane.f32.xlu0 %v95
    %v97 = vpop.xlane.xlu0 %96
    %v98 = vsel %vm52, %v35, 0.0
    %99 = vadd.xlane.f32.xlu0 %v98
    %v100 = vpop.xlane.xlu0 %99
    %v101 = vsel %vm52, %v36, 0.0
    %102 = vadd.xlane.f32.xlu0 %v101
    %v103 = vpop.xlane.xlu0 %102
    %v104 = vsel %vm52, %v37, 0.0
    %105 = vadd.xlane.f32.xlu0 %v104
    %v106 = vpop.xlane.xlu0 %105
    %v107 = vsel %vm52, %v38, 0.0
    %108 = vadd.xlane.f32.xlu0 %v107
    %v109 = vpop.xlane.xlu0 %108
    %v110 = vsel %vm52, %v39, 0.0
    %111 = vadd.xlane.f32.xlu0 %v110
    %v112 = vpop.xlane.xlu0 %111
    %v113 = vsel %vm52, %v40, 0.0
    %114 = vadd.xlane.f32.xlu0 %v113
    %v115 = vpop.xlane.xlu0 %114
    %v116 = vsel %vm52, %v41, 0.0
    %117 = vadd.xlane.f32.xlu0 %v116
    %v118 = vpop.xlane.xlu0 %117
    %v119 = vsel %vm52, %v42, 0.0
    %120 = vadd.xlane.f32.xlu0 %v119
    %v121 = vpop.xlane.xlu0 %120
    %v122 = vsel %vm52, %v43, 0.0
    %123 = vadd.xlane.f32.xlu0 %v122
    %v124 = vpop.xlane.xlu0 %123
    %v125 = vsel %vm52, %v44, 0.0
    %126 = vadd.xlane.f32.xlu0 %v125
    %v127 = vpop.xlane.xlu0 %126
    %v128 = vsel %vm52, %v45, 0.0
    %129 = vadd.xlane.f32.xlu0 %v128
    %v130 = vpop.xlane.xlu0 %129
    %v131 = vsel %vm52, %v46, 0.0
    %132 = vadd.xlane.f32.xlu0 %v131
    %v133 = vpop.xlane.xlu0 %132
    %v134 = vsel %vm52, %v47, 0.0
    %135 = vadd.xlane.f32.xlu0 %v134
    %v136 = vpop.xlane.xlu0 %135
    %v137 = vsel %vm52, %v48, 0.0
    %138 = vadd.xlane.f32.xlu0 %v137
    %v139 = vpop.xlane.xlu0 %138
    %v140 = vsel %vm52, %v49, 0.0
    %141 = vadd.xlane.f32.xlu0 %v140
    %v142 = vpop.xlane.xlu0 %141
    %v143 = vsel %vm52, %v50, 0.0
    %144 = vadd.xlane.f32.xlu0 %v143
    %v145 = vpop.xlane.xlu0 %144
    %v146 = vsel %vm52, %v51, 0.0
    %147 = vadd.xlane.f32.xlu0 %v146
    %v148 = vpop.xlane.xlu0 %147
    %v149 = vrcp.pop 64.0
    %v150 = vmul.f32 %v55, %v149
    %v151 = vmul.f32 %v58, %v149
    %v152 = vmul.f32 %v61, %v149
    %v153 = vmul.f32 %v64, %v149
    %v154 = vmul.f32 %v67, %v149
    %v155 = vmul.f32 %v70, %v149
    %v156 = vmul.f32 %v73, %v149
    %v157 = vmul.f32 %v76, %v149
    %v158 = vmul.f32 %v79, %v149
    %v159 = vmul.f32 %v82, %v149
    %v160 = vmul.f32 %v85, %v149
    %v161 = vmul.f32 %v88, %v149
    %v162 = vmul.f32 %v91, %v149
    %v163 = vmul.f32 %v94, %v149
    %v164 = vmul.f32 %v97, %v149
    %v165 = vmul.f32 %v100, %v149
    %v166 = vmul.f32 %v103, %v149
    %v167 = vmul.f32 %v106, %v149
    %v168 = vmul.f32 %v109, %v149
    %v169 = vmul.f32 %v112, %v149
    %v170 = vmul.f32 %v115, %v149
    %v171 = vmul.f32 %v118, %v149
    %v172 = vmul.f32 %v121, %v149
    %v173 = vmul.f32 %v124, %v149
    %v174 = vmul.f32 %v127, %v149
    %v175 = vmul.f32 %v130, %v149
    %v176 = vmul.f32 %v133, %v149
    %v177 = vmul.f32 %v136, %v149
    %v178 = vmul.f32 %v139, %v149
    %v179 = vmul.f32 %v142, %v149
    %v180 = vmul.f32 %v145, %v149
    %v181 = vmul.f32 %v148, %v149
    %v182 = vld [vmem:[%s1] sm:$0xff]
    %v183 = vld [vmem:[%s1 + $0x8] sm:$0xff]
    %v184 = vld [vmem:[%s1 + $0x10] sm:$0xff]
    %v185 = vld [vmem:[%s1 + $0x18] sm:$0xff]
    %v186 = vld [vmem:[%s1 + $0x20] sm:$0xff]
    %v187 = vld [vmem:[%s1 + $0x28] sm:$0xff]
    %v188 = vld [vmem:[%s1 + $0x30] sm:$0xff]
    %v189 = vld [vmem:[%s1 + $0x38] sm:$0xff]
    %v190 = vld [vmem:[%s1 + $0x40] sm:$0xff]
    %v191 = vld [vmem:[%s1 + $0x48] sm:$0xff]
    %v192 = vld [vmem:[%s1 + $0x50] sm:$0xff]
    %v193 = vld [vmem:[%s1 + $0x58] sm:$0xff]
    %v194 = vld [vmem:[%s1 + $0x60] sm:$0xff]
    %v195 = vld [vmem:[%s1 + $0x68] sm:$0xff]
    %v196 = vld [vmem:[%s1 + $0x70] sm:$0xff]
    %v197 = vld [vmem:[%s1 + $0x78] sm:$0xff]
    %v198 = vld [vmem:[%s2] sm:$0x1]
    %v200 = vlaneseq
    %v201 = vshrl.u32 %v200, 7
    %v202 = vsub.s32 0, %v201
    %v203 = vrot.slane %v198, %v202
    %v237 = vlaneseq
    %v238 = vand.u32 %v237, 127
    %v239 = vlaneseq
    %v240 = vshrl.u32 %v239, 7
    %v241 = vsub.s32 %v238, %v240
    %v242 = vrot.slane %v150, %v241
    %v243 = vadd.s32 %v238, 4294967288
    %v244 = vlaneseq
    %v245 = vshrl.u32 %v244, 7
    %v246 = vsub.s32 %v243, %v245
    %v247 = vrot.slane %v151, %v246
    %vm248 = vcmask 130112
    %v249 = vsel %vm248, %v247, %v242
    %v250 = vadd.s32 %v238, 4294967280
    %v251 = vlaneseq
    %v252 = vshrl.u32 %v251, 7
    %v253 = vsub.s32 %v250, %v252
    %v254 = vrot.slane %v152, %v253
    %vm255 = vcmask 195712
    %v256 = vsel %vm255, %v254, %v249
    %v257 = vadd.s32 %v238, 4294967272
    %v258 = vlaneseq
    %v259 = vshrl.u32 %v258, 7
    %v260 = vsub.s32 %v257, %v259
    %v261 = vrot.slane %v153, %v260
    %vm262 = vcmask 261312
    %v263 = vsel %vm262, %v261, %v256
    %v264 = vadd.s32 %v238, 4294967264
    %v265 = vlaneseq
    %v266 = vshrl.u32 %v265, 7
    %v267 = vsub.s32 %v264, %v266
    %v268 = vrot.slane %v154, %v267
    %vm269 = vcmask 326912
    %v270 = vsel %vm269, %v268, %v263
    %v271 = vadd.s32 %v238, 4294967256
    %v272 = vlaneseq
    %v273 = vshrl.u32 %v272, 7
    %v274 = vsub.s32 %v271, %v273
    %v275 = vrot.slane %v155, %v274
    %vm276 = vcmask 392512
    %v277 = vsel %vm276, %v275, %v270
    %v278 = vadd.s32 %v238, 4294967248
    %v279 = vlaneseq
    %v280 = vshrl.u32 %v279, 7
    %v281 = vsub.s32 %v278, %v280
    %v282 = vrot.slane %v156, %v281
    %vm283 = vcmask 458112
    %v284 = vsel %vm283, %v282, %v277
    %v285 = vadd.s32 %v238, 4294967240
    %v286 = vlaneseq
    %v287 = vshrl.u32 %v286, 7
    %v288 = vsub.s32 %v285, %v287
    %v289 = vrot.slane %v157, %v288
    %vm290 = vcmask 523712
    %v291 = vsel %vm290, %v289, %v284
    %v292 = vadd.s32 %v238, 4294967232
    %v293 = vlaneseq
    %v294 = vshrl.u32 %v293, 7
    %v295 = vsub.s32 %v292, %v294
    %v296 = vrot.slane %v158, %v295
    %vm297 = vcmask 589312
    %v298 = vsel %vm297, %v296, %v291
    %v299 = vadd.s32 %v238, 4294967224
    %v300 = vlaneseq
    %v301 = vshrl.u32 %v300, 7
    %v302 = vsub.s32 %v299, %v301
    %v303 = vrot.slane %v159, %v302
    %vm304 = vcmask 654912
    %v305 = vsel %vm304, %v303, %v298
    %v306 = vadd.s32 %v238, 4294967216
    %v307 = vlaneseq
    %v308 = vshrl.u32 %v307, 7
    %v309 = vsub.s32 %v306, %v308
    %v310 = vrot.slane %v160, %v309
    %vm311 = vcmask 720512
    %v312 = vsel %vm311, %v310, %v305
    %v313 = vadd.s32 %v238, 4294967208
    %v314 = vlaneseq
    %v315 = vshrl.u32 %v314, 7
    %v316 = vsub.s32 %v313, %v315
    %v317 = vrot.slane %v161, %v316
    %vm318 = vcmask 786112
    %v319 = vsel %vm318, %v317, %v312
    %v320 = vadd.s32 %v238, 4294967200
    %v321 = vlaneseq
    %v322 = vshrl.u32 %v321, 7
    %v323 = vsub.s32 %v320, %v322
    %v324 = vrot.slane %v162, %v323
    %vm325 = vcmask 851712
    %v326 = vsel %vm325, %v324, %v319
    %v327 = vadd.s32 %v238, 4294967192
    %v328 = vlaneseq
    %v329 = vshrl.u32 %v328, 7
    %v330 = vsub.s32 %v327, %v329
    %v331 = vrot.slane %v163, %v330
    %vm332 = vcmask 917312
    %v333 = vsel %vm332, %v331, %v326
    %v334 = vadd.s32 %v238, 4294967184
    %v335 = vlaneseq
    %v336 = vshrl.u32 %v335, 7
    %v337 = vsub.s32 %v334, %v336
    %v338 = vrot.slane %v164, %v337
    %vm339 = vcmask 982912
    %v340 = vsel %vm339, %v338, %v333
    %v341 = vadd.s32 %v238, 4294967176
    %v342 = vlaneseq
    %v343 = vshrl.u32 %v342, 7
    %v344 = vsub.s32 %v341, %v343
    %v345 = vrot.slane %v165, %v344
    %vm346 = vcmask 1048512
    %v347 = vsel %vm346, %v345, %v340
    %v348 = vlaneseq
    %v349 = vshrl.u32 %v348, 7
    %v350 = vsub.s32 %v238, %v349
    %v351 = vrot.slane %v166, %v350
    %v352 = vlaneseq
    %v353 = vshrl.u32 %v352, 7
    %v354 = vsub.s32 %v243, %v353
    %v355 = vrot.slane %v167, %v354
    %v356 = vsel %vm248, %v355, %v351
    %v357 = vlaneseq
    %v358 = vshrl.u32 %v357, 7
    %v359 = vsub.s32 %v250, %v358
    %v360 = vrot.slane %v168, %v359
    %v361 = vsel %vm255, %v360, %v356
    %v362 = vlaneseq
    %v363 = vshrl.u32 %v362, 7
    %v364 = vsub.s32 %v257, %v363
    %v365 = vrot.slane %v169, %v364
    %v366 = vsel %vm262, %v365, %v361
    %v367 = vlaneseq
    %v368 = vshrl.u32 %v367, 7
    %v369 = vsub.s32 %v264, %v368
    %v370 = vrot.slane %v170, %v369
    %v371 = vsel %vm269, %v370, %v366
    %v372 = vlaneseq
    %v373 = vshrl.u32 %v372, 7
    %v374 = vsub.s32 %v271, %v373
    %v375 = vrot.slane %v171, %v374
    %v376 = vsel %vm276, %v375, %v371
    %v377 = vlaneseq
    %v378 = vshrl.u32 %v377, 7
    %v379 = vsub.s32 %v278, %v378
    %v380 = vrot.slane %v172, %v379
    %v381 = vsel %vm283, %v380, %v376
    %v382 = vlaneseq
    %v383 = vshrl.u32 %v382, 7
    %v384 = vsub.s32 %v285, %v383
    %v385 = vrot.slane %v173, %v384
    %v386 = vsel %vm290, %v385, %v381
    %v387 = vlaneseq
    %v388 = vshrl.u32 %v387, 7
    %v389 = vsub.s32 %v292, %v388
    %v390 = vrot.slane %v174, %v389
    %v391 = vsel %vm297, %v390, %v386
    %v392 = vlaneseq
    %v393 = vshrl.u32 %v392, 7
    %v394 = vsub.s32 %v299, %v393
    %v395 = vrot.slane %v175, %v394
    %v396 = vsel %vm304, %v395, %v391
    %v397 = vlaneseq
    %v398 = vshrl.u32 %v397, 7
    %v399 = vsub.s32 %v306, %v398
    %v400 = vrot.slane %v176, %v399
    %v401 = vsel %vm311, %v400, %v396
    %v402 = vlaneseq
    %v403 = vshrl.u32 %v402, 7
    %v404 = vsub.s32 %v313, %v403
    %v405 = vrot.slane %v177, %v404
    %v406 = vsel %vm318, %v405, %v401
    %v407 = vlaneseq
    %v408 = vshrl.u32 %v407, 7
    %v409 = vsub.s32 %v320, %v408
    %v410 = vrot.slane %v178, %v409
    %v411 = vsel %vm325, %v410, %v406
    %v412 = vlaneseq
    %v413 = vshrl.u32 %v412, 7
    %v414 = vsub.s32 %v327, %v413
    %v415 = vrot.slane %v179, %v414
    %v416 = vsel %vm332, %v415, %v411
    %v417 = vlaneseq
    %v418 = vshrl.u32 %v417, 7
    %v419 = vsub.s32 %v334, %v418
    %v420 = vrot.slane %v180, %v419
    %v421 = vsel %vm339, %v420, %v416
    %v422 = vlaneseq
    %v423 = vshrl.u32 %v422, 7
    %v424 = vsub.s32 %v341, %v423
    %v425 = vrot.slane %v181, %v424
    %v426 = vsel %vm346, %v425, %v421
    %vm427 = vcmask 1041409
    %v428 = vsel %vm427, %v426, %v347
    %430 = vmatprep.subr.mxu0 0.0
    %431 = vmatpush1.msra.mxu0 %v182
    %432 = vmatprep.subr.mxu0 0.0
    %433 = vmatpush1.msra.mxu0 %v183
    %434 = vmatprep.subr.mxu0 0.0
    %435 = vmatpush1.msra.mxu0 %v184
    %436 = vmatprep.subr.mxu0 0.0
    %437 = vmatpush1.msra.mxu0 %v185
    %438 = vmatprep.subr.mxu0 0.0
    %439 = vmatpush1.msra.mxu0 %v186
    %440 = vmatprep.subr.mxu0 0.0
    %441 = vmatpush1.msra.mxu0 %v187
    %442 = vmatprep.subr.mxu0 0.0
    %443 = vmatpush1.msra.mxu0 %v188
    %444 = vmatprep.subr.mxu0 0.0
    %445 = vmatpush1.msra.mxu0 %v189
    %446 = vmatprep.subr.mxu0 0.0
    %447 = vmatpush1.msra.mxu0 %v190
    %448 = vmatprep.subr.mxu0 0.0
    %449 = vmatpush1.msra.mxu0 %v191
    %450 = vmatprep.subr.mxu0 0.0
    %451 = vmatpush1.msra.mxu0 %v192
    %452 = vmatprep.subr.mxu0 0.0
    %453 = vmatpush1.msra.mxu0 %v193
    %454 = vmatprep.subr.mxu0 0.0
    %455 = vmatpush1.msra.mxu0 %v194
    %456 = vmatprep.subr.mxu0 0.0
    %457 = vmatpush1.msra.mxu0 %v195
    %458 = vmatprep.subr.mxu0 0.0
    %459 = vmatpush1.msra.mxu0 %v196
    %460 = vmatprep.subr.mxu0 0.0
    %461 = vmatpush1.msra.mxu0 %v197
    %462 = vmatprep.subr.mxu0 0.0
    %463 = vmatpush1.msra.mxu0 0.0
    %464 = vmatprep.subr.mxu0 0.0
    %465 = vmatpush1.msra.mxu0 0.0
    %466 = vmatprep.subr.mxu0 0.0
    %467 = vmatpush1.msra.mxu0 0.0
    %468 = vmatprep.subr.mxu0 0.0
    %469 = vmatpush1.msra.mxu0 0.0
    %470 = vmatprep.subr.mxu0 0.0
    %471 = vmatpush1.msra.mxu0 0.0
    %472 = vmatprep.subr.mxu0 0.0
    %473 = vmatpush1.msra.mxu0 0.0
    %474 = vmatprep.subr.mxu0 0.0
    %475 = vmatpush1.msra.mxu0 0.0
    %476 = vmatprep.subr.mxu0 0.0
    %477 = vmatpush1.msra.mxu0 0.0
    %478 = vmatprep.subr.mxu0 0.0
    %479 = vmatpush1.msra.mxu0 0.0
    %480 = vmatprep.subr.mxu0 0.0
    %481 = vmatpush1.msra.mxu0 0.0
    %482 = vmatprep.subr.mxu0 0.0
    %483 = vmatpush1.msra.mxu0 0.0
    %484 = vmatprep.subr.mxu0 0.0
    %485 = vmatpush1.msra.mxu0 0.0
    %486 = vmatprep.subr.mxu0 0.0
    %487 = vmatpush1.msra.mxu0 0.0
    %488 = vmatprep.subr.mxu0 0.0
    %489 = vmatpush1.msra.mxu0 0.0
    %490 = vmatprep.subr.mxu0 0.0
    %491 = vmatpush1.msra.mxu0 0.0
    %492 = vmatprep.subr.mxu0 0.0
    %493 = vmatpush1.msra.mxu0 0.0
    %494 = vmatprep.mubr.f32.mxu0 0.0
    %495 = vmatmul.mubr.f32.gmra.mrb[0].mxu0 %v428
    %v496 = vpop.f32.mrb[0].mxu0
    %v497 = vadd.f32 %v203, %v496
    %v498 = vpop.f32.mrb[0].mxu0
    %499 = vdwg.mxu0
    %500 = vst [vmem:[#allocation2] sm:$0x3] %v497
    %vm501 = vcmp.lt.s32.totalorder %v238, 16
    %v502 = vsel %vm501, %v497, -1e+30
    %vm503 = vcmask 1041408
    %v504 = vsel %vm503, %v502, -inf
    %505 = vmax.xlane.f32.xlu0 %v504
    %v506 = vpop.xlane.xlu0 %505
    %v507 = vsub.f32 %v502, %v506
    %v508 = vmul.f32 %v507, 1.442695
    %v509 = vpow.pop %v508
    %v510 = vsel %vm503, %v509, 0.0
    %511 = vadd.xlane.f32.xlu0 %v510
    %v512 = vpop.xlane.xlu0 %511
    %v513 = vlog2.pop %v512
    %v514 = vmul.f32 %v513, 0.6931472
    %v515 = vadd.f32 %v506, %v514
    %v516 = vld [vmem:[%s3] sm:$0x3]
    %517 = vset.pattern.permute.xlu0 0
    %518 = vperm.xlu0 %517, %v516
    %v519 = vpop.permute.xlu0 %518
    %vm520 = vcmp.eq.s32.totalorder %v238, %v519
    %v521 = vsel %vm520, 1, 0
    %v522 = vcvt.s32.f32 %v521
    %v523 = vmul.f32 %v497, %v522
    %v524 = vsel %vm503, %v523, 0.0
    %525 = vadd.xlane.f32.xlu0 %v524
    %v526 = vpop.xlane.xlu0 %525
    %v527 = vsub.f32 %v515, %v526
    %vm528 = vcmask 1024
    %529 = vst.msk [vmem:[%s5] sm:$0x3] %vm528, %v527
    // Predicated region
    $region18: #{tpu_custom_call.1} parent=1 // pred_check
      _
    $region19: #{tpu_custom_call.1} parent=1 // pred_check_branch
      %531 = sbr.rel (0) target = $region21
    $region20: #{tpu_custom_call.1} parent=1 // pred_region
      %s533 = ssub.s32 32, 32
      %534 = vsyncadd [#allocation3], %s533
      %s536 = sshll.u32 [#allocation2], 4
      %s537 = int_to_ptr.vmem [resolvable:$true] %s536
      %539 = dma.vmem_to_hbm [thread:$0]  %s537, 32, %s4, [#allocation3]
    $region21: #{tpu_custom_call.1} parent=1 // pred_fallthru
      _
    // Predicated region
    $region22: #{tpu_custom_call.1} parent=1 // pred_check
      _
    $region23: #{tpu_custom_call.1} parent=1 // pred_check_branch
      %541 = sbr.rel (0) target = $region25
    $region24: #{tpu_custom_call.1} parent=1 // pred_region
      _
    $region25: #{tpu_custom_call.1} parent=1 // pred_fallthru
      _
    // Predicated region
    $region26: #{tpu_custom_call.1} parent=1 // pred_check
      _
    $region27: #{tpu_custom_call.1} parent=1 // pred_check_branch
      %543 = sbr.rel (0) target = $region29
    $region28: #{tpu_custom_call.1} parent=1 // pred_region
      %544 = dma.done [#allocation3], 32
    $region29: #{tpu_custom_call.1} parent=1 // pred_fallthru
      _
    // Predicated region
    $region30: #{tpu_custom_call.1} parent=1 // pred_check
      _
    $region31: #{tpu_custom_call.1} parent=1 // pred_check_branch
      %546 = sbr.rel (0) target = $region33
    $region32: #{tpu_custom_call.1} parent=1 // pred_region
      _
    $region33: #{tpu_custom_call.1} parent=1 // pred_fallthru
      _
    %547 = vsyncpa [#allocation3], 1

</llo_original>
